<compile_context>
chip_gen: v6e
topology: v6e:2x2x1
jax: 0.10.0
libtpu: 0.0.40
codegen_flags: <defaults>
</compile_context>

<pallas_src>
import jax
import jax.numpy as jnp
import numpy as np
from jax.experimental import pallas as pl
from jax.experimental.pallas import tpu as pltpu


VMEM_LIMIT_BYTES = 32 * 1024 * 1024          # safe on v5e / v6e / v7x
X_BLOCK_BUDGET_BYTES = 4 * 1024 * 1024       # per-grid-step activation block


# ---------------- Pallas kernels ----------------

def bn_sums_kernel(x_ref, sums_ref, acc_ref):
    """Per-channel sum / sum-of-squares, accumulated over an (N, H-tile) grid.

    x_ref:    (1, 2, 2, Tho, Wo, C) block of the pool-parity layout.
    sums_ref: (2, C) output  (row 0 = sum(x), row 1 = sum(x*x)).
    acc_ref:  (2, C) f32 VMEM scratch accumulator (resident across the grid).
    """
    step = pl.program_id(0) * pl.num_programs(1) + pl.program_id(1)

    @pl.when(step == 0)
    def _():
        acc_ref[...] = jnp.zeros_like(acc_ref)

    c = x_ref.shape[-1]
    s = jnp.zeros((c,), jnp.float32)
    sq = jnp.zeros((c,), jnp.float32)
    for i in range(2):                 # 2x2 window parity (static, unrolled)
        for j in range(2):
            v = x_ref[0, i, j].astype(jnp.float32)       # (Tho, Wo, C)
            s = s + jnp.sum(v, axis=(0, 1))
            sq = sq + jnp.sum(v * v, axis=(0, 1))
    acc_ref[0, :] += s
    acc_ref[1, :] += sq
    sums_ref[...] = acc_ref[...]


def transition_kernel(x_ref, sb_ref, w_ref, o_ref):
    """Fused BN(fold) + ReLU + 2x2 avg-pool + 1x1 conv for one (image, H-tile).

    x_ref: (1, 2, 2, Tho, Wo, Cin)   sb_ref: (2, Cin) [scale; bias]
    w_ref: (Cin, Cout)               o_ref:  (1, Tho*Wo, Cout)
    """
    scale = sb_ref[0, :].astype(jnp.float32)
    bias = sb_ref[1, :].astype(jnp.float32)

    def bn_relu(i, j):
        v = x_ref[0, i, j].astype(jnp.float32)           # (Tho, Wo, Cin)
        return jnp.maximum(v * scale + bias, 0.0)

    # 2x2 average pool on the VPU (pool first: avg-pool and 1x1 conv commute).
    pooled = 0.25 * (bn_relu(0, 0) + bn_relu(0, 1) + bn_relu(1, 0) + bn_relu(1, 1))
    tho, wo, cin = pooled.shape
    lhs = pooled.reshape(tho * wo, cin)                  # merge leading dims only

    w = w_ref[...]
    if w.dtype != jnp.float32:                           # bf16 weights -> bf16 MXU inputs
        lhs = lhs.astype(w.dtype)
    z = jnp.dot(lhs, w, preferred_element_type=jnp.float32)   # (Tho*Wo, Cout)
    o_ref[0] = z.astype(o_ref.dtype)


# ---------------- Wrapper ----------------

def _pick_row_tile(Ho, W, Cin, itemsize, budget_bytes=X_BLOCK_BUDGET_BYTES):
    # One pooled-output row pulls in 2*W*Cin input elements.
    row_bytes = 2 * W * Cin * itemsize
    t = int(max(1, min(Ho, budget_bytes // max(row_bytes, 1))))
    while Ho % t:
        t -= 1
    return t


def transition_forward(x_nchw, gamma, beta, conv_w, eps=1e-5, row_tile=None):
    """x_nchw: (N, Cin, H, W); conv_w: (Cout, Cin, 1, 1). Returns (N, Cout, H//2, W//2)."""
    N, Cin, H, W = x_nchw.shape
    Cout = conv_w.shape[0]
    assert H % 2 == 0 and W % 2 == 0, "avg_pool2d(2) path here assumes even H, W"
    Ho, Wo = H // 2, W // 2

    if row_tile is None:
        row_tile = _pick_row_tile(Ho, W, Cin, jnp.dtype(x_nchw.dtype).itemsize)
    assert Ho % row_tile == 0
    n_tiles = Ho // row_tile

    # Single wrapper-side layout transpose (replaces the NCHW->NHWC transpose):
    #   x_r[n, i, j, ho, wo, c] == x[n, c, 2*ho + i, 2*wo + j]
    # Channels land on lanes, the 2x2 window parity on leading axes.
    # Input dtype is preserved (no f32 upcast in HBM).
    x_r = jnp.transpose(x_nchw.reshape(N, Cin, Ho, 2, Wo, 2), (0, 3, 5, 2, 4, 1))

    x_block = (1, 2, 2, row_tile, Wo, Cin)
    x_idx = lambda n, t: (n, 0, 0, t, 0, 0)

    # ---- pass 1: tiled per-channel batch statistics (reduction grid) ----
    sums = pl.pallas_call(
        bn_sums_kernel,
        out_shape=jax.ShapeDtypeStruct((2, Cin), jnp.float32),
        grid=(N, n_tiles),
        in_specs=[pl.BlockSpec(x_block, x_idx)],
        out_specs=pl.BlockSpec((2, Cin), lambda n, t: (0, 0)),
        scratch_shapes=[pltpu.VMEM((2, Cin), jnp.float32)],
        compiler_params=pltpu.CompilerParams(
            dimension_semantics=("arbitrary", "arbitrary"),
            vmem_limit_bytes=VMEM_LIMIT_BYTES),
    )(x_r)

    count = float(N * H * W)
    mean = sums[0] / count
    var = sums[1] / count - mean * mean            # biased var (training-mode BN)
    scale_vec = gamma.astype(jnp.float32) * jax.lax.rsqrt(var + eps)
    bias_vec = beta.astype(jnp.float32) - mean * scale_vec
    sb = jnp.stack([scale_vec, bias_vec])          # (2, Cin), folded BN

    wmat = conv_w[:, :, 0, 0].T                    # (Cin, Cout), original dtype

    # ---- pass 2: fused BN + ReLU + pool + 1x1 conv ----
    out_flat = pl.pallas_call(
        transition_kernel,
        out_shape=jax.ShapeDtypeStruct((N, Ho * Wo, Cout), x_nchw.dtype),
        grid=(N, n_tiles),
        in_specs=[
            pl.BlockSpec(x_block, x_idx),
            pl.BlockSpec((2, Cin), lambda n, t: (0, 0)),
            pl.BlockSpec((Cin, Cout), lambda n, t: (0, 0)),
        ],
        out_specs=pl.BlockSpec((1, row_tile * Wo, Cout), lambda n, t: (n, t, 0)),
        compiler_params=pltpu.CompilerParams(
            dimension_semantics=("parallel", "parallel"),
            vmem_limit_bytes=VMEM_LIMIT_BYTES),
    )(x_r, sb, wmat)

    out = out_flat.reshape(N, Ho, Wo, Cout)
    return jnp.transpose(out, (0, 3, 1, 2))        # back to NCHW


# ---------------- Pure-JAX reference (for sanity check) ----------------

def transition_ref(x, gamma, beta, conv_w, eps=1e-5):
    mean = x.mean(axis=(0, 2, 3))
    var = x.var(axis=(0, 2, 3))
    xn = (x - mean[None, :, None, None]) / jnp.sqrt(var + eps)[None, :, None, None]
    y = jnp.maximum(gamma[None, :, None, None] * xn + beta[None, :, None, None], 0.0)
    z = jnp.einsum('nchw,oc->nohw', y, conv_w[:, :, 0, 0])
    N, Co, H, W = z.shape
    return z.reshape(N, Co, H // 2, 2, W // 2, 2).mean(axis=(3, 5))


# ---------------- Main ----------------

if __name__ == "__main__":
    key = jax.random.PRNGKey(0)
    k_x, k_w = jax.random.split(key)

    N, Cin, H, W = 2, 4, 16, 16
    Cout = 8

    x = jax.random.normal(k_x, (N, Cin, H, W), dtype=jnp.float32)
    gamma = jnp.ones((Cin,), dtype=jnp.float32)        # BN default init
    beta = jnp.zeros((Cin,), dtype=jnp.float32)
    conv_w = 0.1 * jax.random.normal(k_w, (Cout, Cin, 1, 1), dtype=jnp.float32)

    # row_tile=4 -> grid (N, 2): exercises the tiled-accumulation path too.
    out = transition_forward(x, gamma, beta, conv_w, row_tile=4)
    out = jax.block_until_ready(out)

    ref = transition_ref(x, gamma, beta, conv_w)
    assert out.shape == (N, Cout, H // 2, W // 2), out.shape
    np.testing.assert_allclose(np.asarray(out), np.asarray(ref), rtol=1e-4, atol=1e-4)

    # TODO(synk): BatchNorm running-stats buffer update (training side effect)
    # is not modeled; it does not affect the forward output.
    print("KERNEL_OK")
</pallas_src>

<mosaic_0001>
module attributes {stable_mosaic.version = 11 : i64} {
  func.func @bn_sums_kernel(%arg0: i32, %arg1: i32, %arg2: memref<1x2x2x4x8x4xf32, #tpu.memory_space<vmem>>, %arg3: memref<2x4xf32, #tpu.memory_space<vmem>>, %arg4: memref<2x4xf32, #tpu.memory_space<vmem>>) attributes {dimension_semantics = [#tpu.dimension_semantics<arbitrary>, #tpu.dimension_semantics<arbitrary>], iteration_bounds = array<i64: 2, 2>, scalar_prefetch = 0 : i64, scratch_operands = 1 : i64, tpu.core_type = #tpu.core_type<tc>, window_params = [{transform_indices = @transform_0, window_bounds = array<i64: 1, 2, 2, 4, 8, 4>}, {pipeline_mode = #tpu.pipeline_mode<synchronous>, transform_indices = @transform_1, window_bounds = array<i64: 2, 4>}]} {
    %c2_i32 = arith.constant 2 : i32
    %0 = arith.muli %arg0, %c2_i32 : i32
    %1 = arith.addi %0, %arg1 : i32
    %c0_i32 = arith.constant 0 : i32
    %2 = arith.cmpi eq, %1, %c0_i32 : i32
    %3 = arith.extui %2 : i1 to i32
    %c0_i32_0 = arith.constant 0 : i32
    %4 = arith.cmpi ne, %3, %c0_i32_0 : i32
    scf.if %4 {
      %cst_44 = arith.constant 0.000000e+00 : f32
      %49 = vector.broadcast %cst_44 : f32 to vector<2x4xf32>
      %c0_45 = arith.constant 0 : index
      %c0_46 = arith.constant 0 : index
      %50 = vector.load %arg4[%c0_45, %c0_46] : memref<2x4xf32, #tpu.memory_space<vmem>>, vector<2x4xf32>
      tpu.vector_store %arg4[%c0_45, %c0_46], %49 {strides = array<i32>} : memref<2x4xf32, #tpu.memory_space<vmem>>, vector<2x4xf32>,
    } else {
    }
    %cst = arith.constant 0.000000e+00 : f32
    %5 = vector.broadcast %cst : f32 to vector<4xf32>
    %cst_1 = arith.constant 0.000000e+00 : f32
    %6 = vector.broadcast %cst_1 : f32 to vector<4xf32>
    %c0 = arith.constant 0 : index
    %c0_2 = arith.constant 0 : index
    %c0_3 = arith.constant 0 : index
    %c0_4 = arith.constant 0 : index
    %c0_5 = arith.constant 0 : index
    %c0_6 = arith.constant 0 : index
    %7 = vector.load %arg2[%c0, %c0_2, %c0_3, %c0_4, %c0_5, %c0_6] : memref<1x2x2x4x8x4xf32, #tpu.memory_space<vmem>>, vector<1x1x1x4x8x4xf32>
    %8 = vector.shape_cast %7 : vector<1x1x1x4x8x4xf32> to vector<4x8x4xf32>
    %cst_7 = arith.constant dense<0.000000e+00> : vector<4xf32>
    %9 = vector.multi_reduction <add>, %8, %cst_7 [0, 1] : vector<4x8x4xf32> to vector<4xf32>
    %10 = arith.addf %5, %9 : vector<4xf32>
    %11 = arith.mulf %8, %8 : vector<4x8x4xf32>
    %cst_8 = arith.constant dense<0.000000e+00> : vector<4xf32>
    %12 = vector.multi_reduction <add>, %11, %cst_8 [0, 1] : vector<4x8x4xf32> to vector<4xf32>
    %13 = arith.addf %6, %12 : vector<4xf32>
    %c0_9 = arith.constant 0 : index
    %c0_10 = arith.constant 0 : index
    %c1 = arith.constant 1 : index
    %c0_11 = arith.constant 0 : index
    %c0_12 = arith.constant 0 : index
    %c0_13 = arith.constant 0 : index
    %14 = vector.load %arg2[%c0_9, %c0_10, %c1, %c0_11, %c0_12, %c0_13] : memref<1x2x2x4x8x4xf32, #tpu.memory_space<vmem>>, vector<1x1x1x4x8x4xf32>
    %15 = vector.shape_cast %14 : vector<1x1x1x4x8x4xf32> to vector<4x8x4xf32>
    %cst_14 = arith.constant dense<0.000000e+00> : vector<4xf32>
    %16 = vector.multi_reduction <add>, %15, %cst_14 [0, 1] : vector<4x8x4xf32> to vector<4xf32>
    %17 = arith.addf %10, %16 : vector<4xf32>
    %18 = arith.mulf %15, %15 : vector<4x8x4xf32>
    %cst_15 = arith.constant dense<0.000000e+00> : vector<4xf32>
    %19 = vector.multi_reduction <add>, %18, %cst_15 [0, 1] : vector<4x8x4xf32> to vector<4xf32>
    %20 = arith.addf %13, %19 : vector<4xf32>
    %c0_16 = arith.constant 0 : index
    %c1_17 = arith.constant 1 : index
    %c0_18 = arith.constant 0 : index
    %c0_19 = arith.constant 0 : index
    %c0_20 = arith.constant 0 : index
    %c0_21 = arith.constant 0 : index
    %21 = vector.load %arg2[%c0_16, %c1_17, %c0_18, %c0_19, %c0_20, %c0_21] : memref<1x2x2x4x8x4xf32, #tpu.memory_space<vmem>>, vector<1x1x1x4x8x4xf32>
    %22 = vector.shape_cast %21 : vector<1x1x1x4x8x4xf32> to vector<4x8x4xf32>
    %cst_22 = arith.constant dense<0.000000e+00> : vector<4xf32>
    %23 = vector.multi_reduction <add>, %22, %cst_22 [0, 1] : vector<4x8x4xf32> to vector<4xf32>
    %24 = arith.addf %17, %23 : vector<4xf32>
    %25 = arith.mulf %22, %22 : vector<4x8x4xf32>
    %cst_23 = arith.constant dense<0.000000e+00> : vector<4xf32>
    %26 = vector.multi_reduction <add>, %25, %cst_23 [0, 1] : vector<4x8x4xf32> to vector<4xf32>
    %27 = arith.addf %20, %26 : vector<4xf32>
    %c0_24 = arith.constant 0 : index
    %c1_25 = arith.constant 1 : index
    %c1_26 = arith.constant 1 : index
    %c0_27 = arith.constant 0 : index
    %c0_28 = arith.constant 0 : index
    %c0_29 = arith.constant 0 : index
    %28 = vector.load %arg2[%c0_24, %c1_25, %c1_26, %c0_27, %c0_28, %c0_29] : memref<1x2x2x4x8x4xf32, #tpu.memory_space<vmem>>, vector<1x1x1x4x8x4xf32>
    %29 = vector.shape_cast %28 : vector<1x1x1x4x8x4xf32> to vector<4x8x4xf32>
    %cst_30 = arith.constant dense<0.000000e+00> : vector<4xf32>
    %30 = vector.multi_reduction <add>, %29, %cst_30 [0, 1] : vector<4x8x4xf32> to vector<4xf32>
    %31 = arith.addf %24, %30 : vector<4xf32>
    %32 = arith.mulf %29, %29 : vector<4x8x4xf32>
    %cst_31 = arith.constant dense<0.000000e+00> : vector<4xf32>
    %33 = vector.multi_reduction <add>, %32, %cst_31 [0, 1] : vector<4x8x4xf32> to vector<4xf32>
    %34 = arith.addf %27, %33 : vector<4xf32>
    %c0_32 = arith.constant 0 : index
    %c0_33 = arith.constant 0 : index
    %35 = vector.load %arg4[%c0_32, %c0_33] : memref<2x4xf32, #tpu.memory_space<vmem>>, vector<1x4xf32>
    %36 = vector.shape_cast %35 : vector<1x4xf32> to vector<4xf32>
    %37 = arith.addf %36, %31 : vector<4xf32>
    %c0_34 = arith.constant 0 : index
    %c0_35 = arith.constant 0 : index
    %38 = vector.load %arg4[%c0_34, %c0_35] : memref<2x4xf32, #tpu.memory_space<vmem>>, vector<1x4xf32>
    %39 = vector.shape_cast %38 : vector<1x4xf32> to vector<4xf32>
    %40 = vector.shape_cast %37 : vector<4xf32> to vector<1x4xf32>
    tpu.vector_store %arg4[%c0_34, %c0_35], %40 {strides = array<i32>} : memref<2x4xf32, #tpu.memory_space<vmem>>, vector<1x4xf32>,
    %c1_36 = arith.constant 1 : index
    %c0_37 = arith.constant 0 : index
    %41 = vector.load %arg4[%c1_36, %c0_37] : memref<2x4xf32, #tpu.memory_space<vmem>>, vector<1x4xf32>
    %42 = vector.shape_cast %41 : vector<1x4xf32> to vector<4xf32>
    %43 = arith.addf %42, %34 : vector<4xf32>
    %c1_38 = arith.constant 1 : index
    %c0_39 = arith.constant 0 : index
    %44 = vector.load %arg4[%c1_38, %c0_39] : memref<2x4xf32, #tpu.memory_space<vmem>>, vector<1x4xf32>
    %45 = vector.shape_cast %44 : vector<1x4xf32> to vector<4xf32>
    %46 = vector.shape_cast %43 : vector<4xf32> to vector<1x4xf32>
    tpu.vector_store %arg4[%c1_38, %c0_39], %46 {strides = array<i32>} : memref<2x4xf32, #tpu.memory_space<vmem>>, vector<1x4xf32>,
    %c0_40 = arith.constant 0 : index
    %c0_41 = arith.constant 0 : index
    %47 = vector.load %arg4[%c0_40, %c0_41] : memref<2x4xf32, #tpu.memory_space<vmem>>, vector<2x4xf32>
    %c0_42 = arith.constant 0 : index
    %c0_43 = arith.constant 0 : index
    %48 = vector.load %arg3[%c0_42, %c0_43] : memref<2x4xf32, #tpu.memory_space<vmem>>, vector<2x4xf32>
    tpu.vector_store %arg3[%c0_42, %c0_43], %47 {strides = array<i32>} : memref<2x4xf32, #tpu.memory_space<vmem>>, vector<2x4xf32>,
    return
  }
  func.func @transform_0(%arg0: i32, %arg1: i32) -> (i32, i32, i32, i32, i32, i32) {
    %c0_i32 = arith.constant 0 : i32
    %c0_i32_0 = arith.constant 0 : i32
    %c0_i32_1 = arith.constant 0 : i32
    %c0_i32_2 = arith.constant 0 : i32
    %c0_i32_3 = arith.constant 0 : i32
    return %arg0, %c0_i32, %c0_i32_0, %arg1, %c0_i32_1, %c0_i32_2 : i32, i32, i32, i32, i32, i32
  }
  func.func @transform_1(%arg0: i32, %arg1: i32) -> (i32, i32) {
    %c0_i32 = arith.constant 0 : i32
    %c0_i32_0 = arith.constant 0 : i32
    %c0_i32_1 = arith.constant 0 : i32
    return %c0_i32, %c0_i32_0 : i32, i32
  }
}

</mosaic_0001>

<llo_original>
// kernel: tpu_custom_call.1
$region0: #{tpu_custom_call.1}
  #allocation0 [shape = 'u32[]', space=smem, size = 0x4, offset = 0x4, fixed_abs, tag = 'smem constant byte address 0x4 - core index']
  #allocation1 [shape = 'u32[144,128]{1,0:T(1,128)}', space=vmem, size = 0x12000, scoped, tag = 'internal scratch']
  #allocation2 [shape = 'f32[2,4]{1,0:T(2,128)}', space=vmem, size = 0x400, scoped, tag = 'scratch operand']
  %s0 = inlined_call_operand.vmem [shape: f32[2,2,2,8,8,4], index: 0, kind: input, shape index: {}]
  %s1 = inlined_call_operand.hbm [shape: f32[2,4], index: 1, kind: output, shape index: {}]
  %s2 = sld [smem:[#allocation0]]
  $region79: #{tpu_custom_call.1} parent=0
    _
  %s4 = ssub.s32 1, %s2
  %s5 = scalar_select 0, %s4, %s2
  $region1: #{tpu_custom_call.1} parent=0
    #allocation3 [shape = 'u8[131072]{0}', space=vmem, size = 0x20000, scoped, tag = 'input window, operand 0']
    #allocation4 [shape = 'u8[1024]{0}', space=vmem, size = 0x400, scoped, tag = 'output window, operand 0, single buffered']
    #allocation5 [shape = 's32[2]{0}', space=sflag, size = 0x8, scoped, tag = 'scoped memory for tpu_custom_call.1']
    %6 = vsyncpa [#allocation5], 0
    loop: start=0, step=1, limit=6
    $region2: #{tpu_custom_call.1} parent=1 // loop_pre_header
      _
    $region3: #{tpu_custom_call.1} parent=1 // loop_header
      %s8 = sphi 0, %s12
      %p9 = scmp.ge.s32.totalorder %s8, 6
      %s15 = sphi 0, %s27
      %s16 = sphi 0, %s23
      %s17 = sphi 0, %s15
      %s18 = sphi 0, %s16
      %s19 = sphi 0, %s17
      %s20 = sphi 0, %s18
      %s32 = sphi 0, %s34
      %s35 = sphi 0, %s32
      %s36 = sphi 0, %s35
      %s52 = sphi 0, %s36
      %s56 = sphi 0, %s56
      %s58 = sphi 0, %s56
      %s59 = sphi 0, %s58
      %s73 = sphi 0, %s59
    $region4: #{tpu_custom_call.1} parent=1 // loop_header_branch
      %11 = sbr.rel (%p9) target = $region8
    $region5: #{tpu_custom_call.1} parent=1 // loop_body
      %s13 = ssub.s32 %s8, 1
      %s14 = ssub.s32 %s8, 2
      %s21 = sadd.s32 1, %s16
      %p22 = scmp.ge.s32.totalorder %s21, 2
      %s23 = scalar_select %p22, 0, %s21
      %s24 = sadd.s32 1, %s15
      %s25 = scalar_select %p22, %s24, %s15
      %p26 = scmp.ge.s32.totalorder %s25, 2
      %s27 = scalar_select %p26, 0, %s25
      %s28 = ssub.s32 %s15, %s27
      %s29 = ssub.s32 %s16, %s23
      %s30 = sor.u32 %s28, %s29
      %p31 = scmp.eq.s32.totalorder %s30, 0
      %s33 = sadd.s32 %s32, 1
      %s34 = scalar_select %p31, %s32, %s33
      %p37 = pneg %p31
      %p38 = scmp.eq.s32.totalorder %s8, 3
      %p39 = por %p37, %p38
      %p40 = scmp.ne.s32.totalorder %s32, %s35
      %p41 = scmp.eq.s32.totalorder %s8, 0
      %p42 = por %p40, %p41
      %p43 = scmp.ne.s32.totalorder %s32, %s35
      %p44 = scmp.eq.s32.totalorder %s13, 3
      %p45 = por %p43, %p44
      %p46 = scmp.ne.s32.totalorder %s35, %s36
      %p47 = scmp.eq.s32.totalorder %s13, 0
      %p48 = por %p46, %p47
      %p49 = scmp.ne.s32.totalorder %s35, %s36
      %p50 = scmp.eq.s32.totalorder %s14, 3
      %p51 = por %p49, %p50
      %p53 = scmp.ne.s32.totalorder %s36, %s52
      %p54 = scmp.eq.s32.totalorder %s14, 0
      %p55 = por %p53, %p54
      %s57 = sadd.s32 %s56, 1
      %p60 = scmp.eq.s32.totalorder %s8, 3
      %p61 = scmp.ne.s32.totalorder %s56, %s58
      %p62 = scmp.eq.s32.totalorder %s8, 0
      %p63 = por %p61, %p62
      %p64 = scmp.ne.s32.totalorder %s56, %s58
      %p65 = scmp.eq.s32.totalorder %s13, 3
      %p66 = por %p64, %p65
      %p67 = scmp.ne.s32.totalorder %s58, %s59
      %p68 = scmp.eq.s32.totalorder %s13, 0
      %p69 = por %p67, %p68
      %p70 = scmp.ne.s32.totalorder %s58, %s59
      %p71 = scmp.eq.s32.totalorder %s14, 3
      %p72 = por %p70, %p71
      %p74 = scmp.ne.s32.totalorder %s59, %s73
      %p75 = scmp.eq.s32.totalorder %s14, 0
      %p76 = por %p74, %p75
      %p77 = scmp.le.s32.totalorder 1, %s8
      %p78 = scmp.lt.s32.totalorder %s8, 5
      %p79 = pnand %p77, %p78
      %p80 = pneg %p79
      // Predicated region
      $region9: #{tpu_custom_call.1} parent=5 // pred_check
        _
      $region10: #{tpu_custom_call.1} parent=5 // pred_check_branch
        %82 = sbr.rel (%p79) target = $region12
      $region11: #{tpu_custom_call.1} parent=5 // pred_region
        %s83 = ssub.s32 %s8, 1
      $region12: #{tpu_custom_call.1} parent=5 // pred_fallthru
        _
      %p84 = scmp.lt.s32.totalorder %s8, 4
      // Predicated region
      $region13: #{tpu_custom_call.1} parent=5 // pred_check
        %p85 = pneg %p84
      $region14: #{tpu_custom_call.1} parent=5 // pred_check_branch
        %87 = sbr.rel (%p85) target = $region16
      $region15: #{tpu_custom_call.1} parent=5 // pred_region
        // Predicated region
        $region17: #{tpu_custom_call.1} parent=15 // pred_check
          %p88 = pneg %p42
        $region18: #{tpu_custom_call.1} parent=15 // pred_check_branch
          %90 = sbr.rel (%p88) target = $region20
        $region19: #{tpu_custom_call.1} parent=15 // pred_region
          %s91 = sand.u32 %s32, 1
          %s92 = sand.u32 %s32, 1
          %s93 = smul.addr %s92, 128
          %s94 = scalar_lea.vmem [#allocation3], %s93
          %s95 = smul.u32 4, %s16
          %s96 = smul.addr %s15, 32
          %s97 = sadd.s32 %s95, %s96
          %s98 = smul.addr %s97, 8
          %s99 = scalar_lea.vmem %s0, %s98
          // Predicated region
          $region21: #{tpu_custom_call.1} parent=19 // pred_check
            _
          $region22: #{tpu_custom_call.1} parent=19 // pred_check_branch
            %101 = sbr.rel (0) target = $region24
          $region23: #{tpu_custom_call.1} parent=19 // pred_region
            // Predicated region
            $region25: #{tpu_custom_call.1} parent=23 // pred_check
              _
            $region26: #{tpu_custom_call.1} parent=23 // pred_check_branch
              %103 = sbr.rel (0) target = $region28
            $region27: #{tpu_custom_call.1} parent=23 // pred_region
              // Predicated region
              $region40: #{tpu_custom_call.1} parent=27 // pred_check
                _
              $region41: #{tpu_custom_call.1} parent=27 // pred_check_branch
                %149 = sbr.rel (0) target = $region43
              $region42: #{tpu_custom_call.1} parent=27 // pred_region
                loop: start=0, step=1, limit=1
                $region44: #{tpu_custom_call.1} parent=42 // loop_pre_header
                  _
                $region45: #{tpu_custom_call.1} parent=42 // loop_header
                  %s151 = sphi 0, %s155
                  %p152 = scmp.ge.s32.totalorder %s151, 1
                  %s156 = sphi %s99, %s99
                  %s157 = sphi %s94, %s94
                $region46: #{tpu_custom_call.1} parent=42 // loop_header_branch
                  %154 = sbr.rel (%p152) target = $region50
                $region47: #{tpu_custom_call.1} parent=42 // loop_body
                  %v158 = vld [vmem:[%s156] sm:$0xff]
                  %159 = vst [vmem:[%s157] sm:$0xff] %v158
                  %v160 = vld [vmem:[%s156 + $0x8] sm:$0xff]
                  %161 = vst [vmem:[%s157 + $0x8] sm:$0xff] %v160
                  %v162 = vld [vmem:[%s156 + $0x10] sm:$0xff]
                  %163 = vst [vmem:[%s157 + $0x10] sm:$0xff] %v162
                  %v164 = vld [vmem:[%s156 + $0x18] sm:$0xff]
                  %165 = vst [vmem:[%s157 + $0x18] sm:$0xff] %v164
                  %v166 = vld [vmem:[%s156 + $0x40] sm:$0xff]
                  %167 = vst [vmem:[%s157 + $0x20] sm:$0xff] %v166
                  %v168 = vld [vmem:[%s156 + $0x48] sm:$0xff]
                  %169 = vst [vmem:[%s157 + $0x28] sm:$0xff] %v168
                  %v170 = vld [vmem:[%s156 + $0x50] sm:$0xff]
                  %171 = vst [vmem:[%s157 + $0x30] sm:$0xff] %v170
                  %v172 = vld [vmem:[%s156 + $0x58] sm:$0xff]
                  %173 = vst [vmem:[%s157 + $0x38] sm:$0xff] %v172
                  %v174 = vld [vmem:[%s156 + $0x80] sm:$0xff]
                  %175 = vst [vmem:[%s157 + $0x40] sm:$0xff] %v174
                  %v176 = vld [vmem:[%s156 + $0x88] sm:$0xff]
                  %177 = vst [vmem:[%s157 + $0x48] sm:$0xff] %v176
                  %v178 = vld [vmem:[%s156 + $0x90] sm:$0xff]
                  %179 = vst [vmem:[%s157 + $0x50] sm:$0xff] %v178
                  %v180 = vld [vmem:[%s156 + $0x98] sm:$0xff]
                  %181 = vst [vmem:[%s157 + $0x58] sm:$0xff] %v180
                  %v182 = vld [vmem:[%s156 + $0xc0] sm:$0xff]
                  %183 = vst [vmem:[%s157 + $0x60] sm:$0xff] %v182
                  %v184 = vld [vmem:[%s156 + $0xc8] sm:$0xff]
                  %185 = vst [vmem:[%s157 + $0x68] sm:$0xff] %v184
                  %v186 = vld [vmem:[%s156 + $0xd0] sm:$0xff]
                  %187 = vst [vmem:[%s157 + $0x70] sm:$0xff] %v186
                  %v188 = vld [vmem:[%s156 + $0xd8] sm:$0xff]
                  %189 = vst [vmem:[%s157 + $0x78] sm:$0xff] %v188
                $region48: #{tpu_custom_call.1} parent=42 // loop_footer
                  %s155 = sadd.s32 1, %s151
                $region49: #{tpu_custom_call.1} parent=42 // loop_footer_branch
                  %150 = sbr.rel target = $region45
                $region50: #{tpu_custom_call.1} parent=42 // loop_exit
                  _
              $region43: #{tpu_custom_call.1} parent=27 // pred_fallthru
                _
              // Predicated region
              $region51: #{tpu_custom_call.1} parent=27 // pred_check
                _
              $region52: #{tpu_custom_call.1} parent=27 // pred_check_branch
                %191 = sbr.rel target = $region54
              $region53: #{tpu_custom_call.1} parent=27 // pred_region
                _
              $region54: #{tpu_custom_call.1} parent=27 // pred_fallthru
                _
            $region28: #{tpu_custom_call.1} parent=23 // pred_fallthru
              _
            // Predicated region
            $region29: #{tpu_custom_call.1} parent=23 // pred_check
              _
            $region30: #{tpu_custom_call.1} parent=23 // pred_check_branch
              %105 = sbr.rel target = $region32
            $region31: #{tpu_custom_call.1} parent=23 // pred_region
              %s107 = ssub.s32 256, 1
              loop: start=0, step=1, limit=1
              $region33: #{tpu_custom_call.1} parent=31 // loop_pre_header
                _
              $region34: #{tpu_custom_call.1} parent=31 // loop_header
                %s109 = sphi 0, %s113
                %p110 = scmp.ge.s32.totalorder %s109, 1
                %s114 = sphi %s99, %s99
                %s115 = sphi %s94, %s94
              $region35: #{tpu_custom_call.1} parent=31 // loop_header_branch
                %112 = sbr.rel (%p110) target = $region39
              $region36: #{tpu_custom_call.1} parent=31 // loop_body
                %v116 = vld [vmem:[%s114] sm:%s107]
                %117 = vst [vmem:[%s115] sm:%s107] %v116
                %v118 = vld [vmem:[%s114 + $0x8] sm:%s107]
                %119 = vst [vmem:[%s115 + $0x8] sm:%s107] %v118
                %v120 = vld [vmem:[%s114 + $0x10] sm:%s107]
                %121 = vst [vmem:[%s115 + $0x10] sm:%s107] %v120
                %v122 = vld [vmem:[%s114 + $0x18] sm:%s107]
                %123 = vst [vmem:[%s115 + $0x18] sm:%s107] %v122
                %v124 = vld [vmem:[%s114 + $0x40] sm:%s107]
                %125 = vst [vmem:[%s115 + $0x20] sm:%s107] %v124
                %v126 = vld [vmem:[%s114 + $0x48] sm:%s107]
                %127 = vst [vmem:[%s115 + $0x28] sm:%s107] %v126
                %v128 = vld [vmem:[%s114 + $0x50] sm:%s107]
                %129 = vst [vmem:[%s115 + $0x30] sm:%s107] %v128
                %v130 = vld [vmem:[%s114 + $0x58] sm:%s107]
                %131 = vst [vmem:[%s115 + $0x38] sm:%s107] %v130
                %v132 = vld [vmem:[%s114 + $0x80] sm:%s107]
                %133 = vst [vmem:[%s115 + $0x40] sm:%s107] %v132
                %v134 = vld [vmem:[%s114 + $0x88] sm:%s107]
                %135 = vst [vmem:[%s115 + $0x48] sm:%s107] %v134
                %v136 = vld [vmem:[%s114 + $0x90] sm:%s107]
                %137 = vst [vmem:[%s115 + $0x50] sm:%s107] %v136
                %v138 = vld [vmem:[%s114 + $0x98] sm:%s107]
                %139 = vst [vmem:[%s115 + $0x58] sm:%s107] %v138
                %v140 = vld [vmem:[%s114 + $0xc0] sm:%s107]
                %141 = vst [vmem:[%s115 + $0x60] sm:%s107] %v140
                %v142 = vld [vmem:[%s114 + $0xc8] sm:%s107]
                %143 = vst [vmem:[%s115 + $0x68] sm:%s107] %v142
                %v144 = vld [vmem:[%s114 + $0xd0] sm:%s107]
                %145 = vst [vmem:[%s115 + $0x70] sm:%s107] %v144
                %v146 = vld [vmem:[%s114 + $0xd8] sm:%s107]
                %147 = vst [vmem:[%s115 + $0x78] sm:%s107] %v146
              $region37: #{tpu_custom_call.1} parent=31 // loop_footer
                %s113 = sadd.s32 1, %s109
              $region38: #{tpu_custom_call.1} parent=31 // loop_footer_branch
                %108 = sbr.rel target = $region34
              $region39: #{tpu_custom_call.1} parent=31 // loop_exit
                _
            $region32: #{tpu_custom_call.1} parent=23 // pred_fallthru
              _
          $region24: #{tpu_custom_call.1} parent=19 // pred_fallthru
            _
          %192 = vnop
        $region20: #{tpu_custom_call.1} parent=15 // pred_fallthru
          _
      $region16: #{tpu_custom_call.1} parent=5 // pred_fallthru
        _
      %p193 = scmp.le.s32.totalorder 1, %s8
      %p194 = scmp.lt.s32.totalorder %s8, 5
      %p195 = pnand %p193, %p194
      %p196 = pneg %p195
      // Predicated region
      $region55: #{tpu_custom_call.1} parent=5 // pred_check
        _
      $region56: #{tpu_custom_call.1} parent=5 // pred_check_branch
        %198 = sbr.rel (%p195) target = $region58
      $region57: #{tpu_custom_call.1} parent=5 // pred_region
        %s199 = ssub.s32 %s8, 1
        %s200 = sand.u32 %s35, 1
        %s201 = sand.u32 %s35, 1
        %s202 = smul.addr %s201, 128
        %s203 = scalar_lea.vmem [#allocation3], %s202
        // Predicated region
        $region59: #{tpu_custom_call.1} parent=57 // pred_check
          %p204 = pneg %p48
        $region60: #{tpu_custom_call.1} parent=57 // pred_check_branch
          %206 = sbr.rel (%p204) target = $region62
        $region61: #{tpu_custom_call.1} parent=57 // pred_region
          _
        $region62: #{tpu_custom_call.1} parent=57 // pred_fallthru
          _
        %s207 = sand.u32 %s35, 1
        %s208 = sand.u32 %s35, 1
        %s209 = smul.addr %s208, 128
        %s210 = scalar_lea.vmem [#allocation3], %s209
        %p211 = pneg %p48
        %p212 = pneg %p45
        %p213 = pneg %p69
        %p214 = pneg %p66
        %s215 = smul.u32 4, %s18
        %s216 = smul.u32 %s17, 2
        %s217 = sadd.s32 %s216, %s18
        %p218 = scmp.eq.s32.totalorder %s217, 0
        // Predicated region
        $region63: #{tpu_custom_call.1} parent=57 // pred_check
          %p219 = pneg %p218
        $region64: #{tpu_custom_call.1} parent=57 // pred_check_branch
          %221 = sbr.rel (%p219) target = $region66
        $region65: #{tpu_custom_call.1} parent=57 // pred_region
          %vm222 = vcmask 25600
          %223 = vst.msk [vmem:[#allocation2] sm:$0x3] %vm222, 0.0
        $region66: #{tpu_custom_call.1} parent=57 // pred_fallthru
          _
        %v224 = vld [vmem:[%s203] sm:$0xff]
        %v225 = vld [vmem:[%s203 + $0x8] sm:$0xff]
        %v226 = vld [vmem:[%s203 + $0x10] sm:$0xff]
        %v227 = vld [vmem:[%s203 + $0x18] sm:$0xff]
        %vm228 = vcmask 31744
        %v229 = vsel %vm228, %v224, 0.0
        %v230 = vsel %vm228, %v225, 0.0
        %v231 = vadd.f32 %v229, %v230
        %v232 = vsel %vm228, %v226, 0.0
        %v233 = vadd.f32 %v231, %v232
        %v234 = vsel %vm228, %v227, 0.0
        %v235 = vadd.f32 %v233, %v234
        %v236 = vrot.slane %v235, 4
        %v237 = vadd.f32 %v235, %v236
        %v238 = vrot.slane %v237, 2
        %v239 = vadd.f32 %v237, %v238
        %v240 = vrot.slane %v239, 1
        %v241 = vadd.f32 %v239, %v240
        %v242 = vadd.f32 %v241, 0.0
        %v243 = vmul.f32 %v224, %v224
        %v244 = vmul.f32 %v225, %v225
        %v245 = vmul.f32 %v226, %v226
        %v246 = vmul.f32 %v227, %v227
        %v247 = vsel %vm228, %v243, 0.0
        %v248 = vsel %vm228, %v244, 0.0
        %v249 = vadd.f32 %v247, %v248
        %v250 = vsel %vm228, %v245, 0.0
        %v251 = vadd.f32 %v249, %v250
        %v252 = vsel %vm228, %v246, 0.0
        %v253 = vadd.f32 %v251, %v252
        %v254 = vrot.slane %v253, 4
        %v255 = vadd.f32 %v253, %v254
        %v256 = vrot.slane %v255, 2
        %v257 = vadd.f32 %v255, %v256
        %v258 = vrot.slane %v257, 1
        %v259 = vadd.f32 %v257, %v258
        %v260 = vadd.f32 %v259, 0.0
        %s261 = scalar_lea.vmem %s203, 32 [#allocation3]
        %v262 = vld [vmem:[%s261] sm:$0xff]
        %v263 = vld [vmem:[%s261 + $0x8] sm:$0xff]
        %v264 = vld [vmem:[%s261 + $0x10] sm:$0xff]
        %v265 = vld [vmem:[%s261 + $0x18] sm:$0xff]
        %v266 = vsel %vm228, %v262, 0.0
        %v267 = vsel %vm228, %v263, 0.0
        %v268 = vadd.f32 %v266, %v267
        %v269 = vsel %vm228, %v264, 0.0
        %v270 = vadd.f32 %v268, %v269
        %v271 = vsel %vm228, %v265, 0.0
        %v272 = vadd.f32 %v270, %v271
        %v273 = vrot.slane %v272, 4
        %v274 = vadd.f32 %v272, %v273
        %v275 = vrot.slane %v274, 2
        %v276 = vadd.f32 %v274, %v275
        %v277 = vrot.slane %v276, 1
        %v278 = vadd.f32 %v276, %v277
        %v279 = vadd.f32 %v242, %v278
        %v280 = vmul.f32 %v262, %v262
        %v281 = vmul.f32 %v263, %v263
        %v282 = vmul.f32 %v264, %v264
        %v283 = vmul.f32 %v265, %v265
        %v284 = vsel %vm228, %v280, 0.0
        %v285 = vsel %vm228, %v281, 0.0
        %v286 = vadd.f32 %v284, %v285
        %v287 = vsel %vm228, %v282, 0.0
        %v288 = vadd.f32 %v286, %v287
        %v289 = vsel %vm228, %v283, 0.0
        %v290 = vadd.f32 %v288, %v289
        %v291 = vrot.slane %v290, 4
        %v292 = vadd.f32 %v290, %v291
        %v293 = vrot.slane %v292, 2
        %v294 = vadd.f32 %v292, %v293
        %v295 = vrot.slane %v294, 1
        %v296 = vadd.f32 %v294, %v295
        %v297 = vadd.f32 %v260, %v296
        %s298 = scalar_lea.vmem %s203, 64 [#allocation3]
        %v299 = vld [vmem:[%s298] sm:$0xff]
        %v300 = vld [vmem:[%s298 + $0x8] sm:$0xff]
        %v301 = vld [vmem:[%s298 + $0x10] sm:$0xff]
        %v302 = vld [vmem:[%s298 + $0x18] sm:$0xff]
        %v303 = vsel %vm228, %v299, 0.0
        %v304 = vsel %vm228, %v300, 0.0
        %v305 = vadd.f32 %v303, %v304
        %v306 = vsel %vm228, %v301, 0.0
        %v307 = vadd.f32 %v305, %v306
        %v308 = vsel %vm228, %v302, 0.0
        %v309 = vadd.f32 %v307, %v308
        %v310 = vrot.slane %v309, 4
        %v311 = vadd.f32 %v309, %v310
        %v312 = vrot.slane %v311, 2
        %v313 = vadd.f32 %v311, %v312
        %v314 = vrot.slane %v313, 1
        %v315 = vadd.f32 %v313, %v314
        %v316 = vadd.f32 %v279, %v315
        %v317 = vmul.f32 %v299, %v299
        %v318 = vmul.f32 %v300, %v300
        %v319 = vmul.f32 %v301, %v301
        %v320 = vmul.f32 %v302, %v302
        %v321 = vsel %vm228, %v317, 0.0
        %v322 = vsel %vm228, %v318, 0.0
        %v323 = vadd.f32 %v321, %v322
        %v324 = vsel %vm228, %v319, 0.0
        %v325 = vadd.f32 %v323, %v324
        %v326 = vsel %vm228, %v320, 0.0
        %v327 = vadd.f32 %v325, %v326
        %v328 = vrot.slane %v327, 4
        %v329 = vadd.f32 %v327, %v328
        %v330 = vrot.slane %v329, 2
        %v331 = vadd.f32 %v329, %v330
        %v332 = vrot.slane %v331, 1
        %v333 = vadd.f32 %v331, %v332
        %v334 = vadd.f32 %v297, %v333
        %s335 = scalar_lea.vmem %s203, 96 [#allocation3]
        %v336 = vld [vmem:[%s335] sm:$0xff]
        %v337 = vld [vmem:[%s335 + $0x8] sm:$0xff]
        %v338 = vld [vmem:[%s335 + $0x10] sm:$0xff]
        %v339 = vld [vmem:[%s335 + $0x18] sm:$0xff]
        %v340 = vsel %vm228, %v336, 0.0
        %v341 = vsel %vm228, %v337, 0.0
        %v342 = vadd.f32 %v340, %v341
        %v343 = vsel %vm228, %v338, 0.0
        %v344 = vadd.f32 %v342, %v343
        %v345 = vsel %vm228, %v339, 0.0
        %v346 = vadd.f32 %v344, %v345
        %v347 = vrot.slane %v346, 4
        %v348 = vadd.f32 %v346, %v347
        %v349 = vrot.slane %v348, 2
        %v350 = vadd.f32 %v348, %v349
        %v351 = vrot.slane %v350, 1
        %v352 = vadd.f32 %v350, %v351
        %v353 = vadd.f32 %v316, %v352
        %v354 = vmul.f32 %v336, %v336
        %v355 = vmul.f32 %v337, %v337
        %v356 = vmul.f32 %v338, %v338
        %v357 = vmul.f32 %v339, %v339
        %v358 = vsel %vm228, %v354, 0.0
        %v359 = vsel %vm228, %v355, 0.0
        %v360 = vadd.f32 %v358, %v359
        %v361 = vsel %vm228, %v356, 0.0
        %v362 = vadd.f32 %v360, %v361
        %v363 = vsel %vm228, %v357, 0.0
        %v364 = vadd.f32 %v362, %v363
        %v365 = vrot.slane %v364, 4
        %v366 = vadd.f32 %v364, %v365
        %v367 = vrot.slane %v366, 2
        %v368 = vadd.f32 %v366, %v367
        %v369 = vrot.slane %v368, 1
        %v370 = vadd.f32 %v368, %v369
        %v371 = vadd.f32 %v334, %v370
        %v372 = vld [vmem:[#allocation2] sm:$0x1]
        %v373 = vadd.f32 %v372, %v353
        %vm374 = vcmask 24576
        %375 = vst.msk [vmem:[#allocation2] sm:$0x1] %vm374, %v373
        %v376 = vld [vmem:[#allocation2 + $0x1] sm:$0x1]
        %v377 = vadd.f32 %v376, %v371
        %378 = vst.msk [vmem:[#allocation2 + $0x1] sm:$0x1] %vm374, %v377
        %v379 = vld [vmem:[#allocation2] sm:$0x3]
        %vm380 = vcmask 25600
        %381 = vst.msk [vmem:[#allocation4] sm:$0x3] %vm380, %v379
        // Predicated region
        $region67: #{tpu_custom_call.1} parent=57 // pred_check
          %p382 = pneg %p66
        $region68: #{tpu_custom_call.1} parent=57 // pred_check_branch
          %384 = sbr.rel (%p382) target = $region70
        $region69: #{tpu_custom_call.1} parent=57 // pred_region
          %s386 = ssub.s32 32, 32
          %387 = vsyncadd [#allocation5], %s386
          %s389 = sshll.u32 [#allocation4], 4
          %s390 = int_to_ptr.vmem [resolvable:$true] %s389
          %392 = dma.vmem_to_hbm [thread:$0]  %s390, 32, %s1, [#allocation5]
        $region70: #{tpu_custom_call.1} parent=57 // pred_fallthru
          _
        // Predicated region
        $region71: #{tpu_custom_call.1} parent=57 // pred_check
          %p393 = pneg %p66
        $region72: #{tpu_custom_call.1} parent=57 // pred_check_branch
          %395 = sbr.rel (%p393) target = $region74
        $region73: #{tpu_custom_call.1} parent=57 // pred_region
          %396 = dma.done [#allocation5], 32
        $region74: #{tpu_custom_call.1} parent=57 // pred_fallthru
          _
      $region58: #{tpu_custom_call.1} parent=5 // pred_fallthru
        _
      %p397 = scmp.le.s32.totalorder 2, %s8
      // Predicated region
      $region75: #{tpu_custom_call.1} parent=5 // pred_check
        %p398 = pneg %p397
      $region76: #{tpu_custom_call.1} parent=5 // pred_check_branch
        %400 = sbr.rel (%p398) target = $region78
      $region77: #{tpu_custom_call.1} parent=5 // pred_region
        %s401 = ssub.s32 %s8, 2
      $region78: #{tpu_custom_call.1} parent=5 // pred_fallthru
        _
    $region6: #{tpu_custom_call.1} parent=1 // loop_footer
      %s12 = sadd.s32 1, %s8
    $region7: #{tpu_custom_call.1} parent=1 // loop_footer_branch
      %7 = sbr.rel target = $region3
    $region8: #{tpu_custom_call.1} parent=1 // loop_exit
      _
    %402 = vsyncpa [#allocation5], 1
    %s403 = scalar_lea.sflag [#allocation5], 1
    %404 = vsyncpa %s403, 1

</llo_original>
